<compile_context>
chip_gen: v5e
topology: v5e:2x2
jax: 0.10.0
libtpu: 0.0.40
codegen_flags: <defaults>
</compile_context>

<pallas_src>
import functools
import math

import jax
import jax.numpy as jnp
from jax.experimental import pallas as pl
from jax.experimental.pallas import tpu as pltpu

LN_EPS = 1e-5
VMEM_LIMIT = 48 * 1024 * 1024  # < 64 MiB (v7x physical), > 16/32 MiB defaults


# ----------------------------------------------------------------------------
# tiling helpers
# ----------------------------------------------------------------------------
def _round_up(x, m):
    return ((x + m - 1) // m) * m


def _pick_lane_tile(dim, target):
    """Largest 128-multiple divisor of `dim` that is <= target, else full dim."""
    for t in (target, 512, 256, 128):
        if t <= dim and dim % t == 0 and t % 128 == 0:
            return t
    return dim


def _pick_sublane_tile(dim, target):
    """Largest 8-multiple divisor of `dim` that is <= target, else full dim."""
    for t in (target, 512, 256, 128, 64, 32, 16, 8):
        if t <= dim and dim % t == 0:
            return t
    return dim


def _pick_row_tile(M, target):
    """Return (padded_M, tm): rows padded so tm | padded_M and 8 | tm."""
    if M >= target:
        return _round_up(M, target), target
    tm = _round_up(M, 8)
    return tm, tm


# ----------------------------------------------------------------------------
# Tiled linear:  y = x @ w + b   (optional ReLU)
# grid = (M tiles, N tiles, K tiles);  K is the reduction axis.
# For f32 outputs we accumulate directly into the output block (no scratch).
# ----------------------------------------------------------------------------
def _linear_kernel_inplace(x_ref, w_ref, b_ref, o_ref, *, activation, nk):
    k = pl.program_id(2)

    @pl.when(k == 0)
    def _init():
        o_ref[...] = jnp.zeros_like(o_ref)

    o_ref[...] += jnp.dot(x_ref[...], w_ref[...],
                          preferred_element_type=jnp.float32)

    @pl.when(k == nk - 1)
    def _finalize():
        y = o_ref[...] + b_ref[...]
        if activation == "relu":
            y = jnp.maximum(y, 0.0)
        o_ref[...] = y


def _linear_kernel_scratch(x_ref, w_ref, b_ref, o_ref, acc_ref, *, activation, nk):
    k = pl.program_id(2)

    @pl.when(k == 0)
    def _init():
        acc_ref[...] = jnp.zeros_like(acc_ref)

    acc_ref[...] += jnp.dot(x_ref[...], w_ref[...],
                            preferred_element_type=jnp.float32)

    @pl.when(k == nk - 1)
    def _finalize():
        y = acc_ref[...] + b_ref[...]
        if activation == "relu":
            y = jnp.maximum(y, 0.0)
        o_ref[...] = y.astype(o_ref.dtype)


def linear(x2d, w, b, activation=None, *, tm=512, tn=512, tk=512):
    M, Din = x2d.shape
    Dout = w.shape[1]
    Mp, tm = _pick_row_tile(M, tm)
    tn = _pick_lane_tile(Dout, tn)
    tk = _pick_lane_tile(Din, tk)
    if Mp != M:
        x2d = jnp.pad(x2d, ((0, Mp - M), (0, 0)))
    nm, nn, nk = Mp // tm, Dout // tn, Din // tk

    if x2d.dtype == jnp.float32:
        kernel = functools.partial(_linear_kernel_inplace,
                                   activation=activation, nk=nk)
        scratch = []
    else:
        kernel = functools.partial(_linear_kernel_scratch,
                                   activation=activation, nk=nk)
        scratch = [pltpu.VMEM((tm, tn), jnp.float32)]

    out = pl.pallas_call(
        kernel,
        out_shape=jax.ShapeDtypeStruct((Mp, Dout), x2d.dtype),
        grid=(nm, nn, nk),
        in_specs=[
            pl.BlockSpec((tm, tk), lambda i, j, k: (i, k)),
            pl.BlockSpec((tk, tn), lambda i, j, k: (k, j)),
            pl.BlockSpec((1, tn), lambda i, j, k: (0, j)),
        ],
        out_specs=pl.BlockSpec((tm, tn), lambda i, j, k: (i, j)),
        scratch_shapes=scratch,
        compiler_params=pltpu.CompilerParams(
            dimension_semantics=("parallel", "parallel", "arbitrary"),
            vmem_limit_bytes=VMEM_LIMIT),
    )(x2d, w, b.reshape(1, Dout))
    return out[:M] if Mp != M else out


# ----------------------------------------------------------------------------
# Fused:  LayerNorm(res + (x @ w + b))
# Full output width (d_model) stays in one block so the LN reduction happens
# in the epilogue; grid = (M tiles, K tiles).
# ----------------------------------------------------------------------------
def _linear_res_ln_kernel(x_ref, w_ref, b_ref, res_ref, g_ref, beta_ref,
                          o_ref, acc_ref, *, nk, eps):
    k = pl.program_id(1)

    @pl.when(k == 0)
    def _init():
        acc_ref[...] = jnp.zeros_like(acc_ref)

    acc_ref[...] += jnp.dot(x_ref[...], w_ref[...],
                            preferred_element_type=jnp.float32)

    @pl.when(k == nk - 1)
    def _finalize():
        h = acc_ref[...] + b_ref[...] + res_ref[...].astype(jnp.float32)
        mean = jnp.mean(h, axis=-1, keepdims=True)
        var = jnp.mean((h - mean) ** 2, axis=-1, keepdims=True)
        norm = (h - mean) * jax.lax.rsqrt(var + eps)
        o_ref[...] = (norm * g_ref[...] + beta_ref[...]).astype(o_ref.dtype)


def linear_residual_layernorm(x2d, w, b, res2d, gamma, beta, *, tm=256, tk=512):
    M, Din = x2d.shape
    Dout = w.shape[1]
    Mp, tm = _pick_row_tile(M, tm)
    tk = _pick_lane_tile(Din, tk)
    if Mp != M:
        pad = ((0, Mp - M), (0, 0))
        x2d = jnp.pad(x2d, pad)
        res2d = jnp.pad(res2d, pad)
    nm, nk = Mp // tm, Din // tk
    out = pl.pallas_call(
        functools.partial(_linear_res_ln_kernel, nk=nk, eps=LN_EPS),
        out_shape=jax.ShapeDtypeStruct((Mp, Dout), x2d.dtype),
        grid=(nm, nk),
        in_specs=[
            pl.BlockSpec((tm, tk), lambda i, k: (i, k)),
            pl.BlockSpec((tk, Dout), lambda i, k: (k, 0)),
            pl.BlockSpec((1, Dout), lambda i, k: (0, 0)),
            pl.BlockSpec((tm, Dout), lambda i, k: (i, 0)),
            pl.BlockSpec((1, Dout), lambda i, k: (0, 0)),
            pl.BlockSpec((1, Dout), lambda i, k: (0, 0)),
        ],
        out_specs=pl.BlockSpec((tm, Dout), lambda i, k: (i, 0)),
        scratch_shapes=[pltpu.VMEM((tm, Dout), jnp.float32)],
        compiler_params=pltpu.CompilerParams(
            dimension_semantics=("parallel", "arbitrary"),
            vmem_limit_bytes=VMEM_LIMIT),
    )(x2d, w, b.reshape(1, Dout), res2d,
      gamma.reshape(1, Dout), beta.reshape(1, Dout))
    return out[:M] if Mp != M else out


# ----------------------------------------------------------------------------
# Row-tiled plain LayerNorm (final norm of the decoder stack).
# ----------------------------------------------------------------------------
def _ln_kernel(x_ref, g_ref, b_ref, o_ref, *, eps):
    h = x_ref[...].astype(jnp.float32)
    mean = jnp.mean(h, axis=-1, keepdims=True)
    var = jnp.mean((h - mean) ** 2, axis=-1, keepdims=True)
    norm = (h - mean) * jax.lax.rsqrt(var + eps)
    o_ref[...] = (norm * g_ref[...] + b_ref[...]).astype(o_ref.dtype)


def layernorm(x2d, gamma, beta, *, tm=512):
    M, D = x2d.shape
    Mp, tm = _pick_row_tile(M, tm)
    if Mp != M:
        x2d = jnp.pad(x2d, ((0, Mp - M), (0, 0)))
    nm = Mp // tm
    out = pl.pallas_call(
        functools.partial(_ln_kernel, eps=LN_EPS),
        out_shape=jax.ShapeDtypeStruct((Mp, D), x2d.dtype),
        grid=(nm,),
        in_specs=[
            pl.BlockSpec((tm, D), lambda i: (i, 0)),
            pl.BlockSpec((1, D), lambda i: (0, 0)),
            pl.BlockSpec((1, D), lambda i: (0, 0)),
        ],
        out_specs=pl.BlockSpec((tm, D), lambda i: (i, 0)),
        compiler_params=pltpu.CompilerParams(
            dimension_semantics=("parallel",),
            vmem_limit_bytes=VMEM_LIMIT),
    )(x2d, gamma.reshape(1, D), beta.reshape(1, D))
    return out[:M] if Mp != M else out


# ----------------------------------------------------------------------------
# Flash-tiled multi-head attention.
# Inputs are head-major (B, H, S, dk); grid = (B, Sq tiles, KV tiles) with the
# KV axis as the online-softmax reduction.  All heads in a tile are processed
# by ONE batched dot_general (no static per-head unroll, no explicit K.T);
# the softmax scale is folded into Q.
# ----------------------------------------------------------------------------
def _flash_attn_kernel(q_ref, k_ref, v_ref, o_ref, m_ref, l_ref, acc_ref,
                       *, nkv, scale):
    ki = pl.program_id(2)

    @pl.when(ki == 0)
    def _init():
        m_ref[...] = jnp.full(m_ref.shape, -jnp.inf, jnp.float32)
        l_ref[...] = jnp.zeros_like(l_ref)
        acc_ref[...] = jnp.zeros_like(acc_ref)

    q = q_ref[0].astype(jnp.float32) * scale              # (H, tq, dk)
    s = jnp.einsum("hqd,hkd->hqk", q, k_ref[0],
                   preferred_element_type=jnp.float32)    # (H, tq, tkv)

    m_prev = m_ref[...]
    m_new = jnp.maximum(m_prev, jnp.max(s, axis=-1, keepdims=True))
    alpha = jnp.exp(m_prev - m_new)
    p = jnp.exp(s - m_new)
    l_ref[...] = alpha * l_ref[...] + jnp.sum(p, axis=-1, keepdims=True)
    acc_ref[...] = alpha * acc_ref[...] + jnp.einsum(
        "hqk,hkd->hqd", p.astype(v_ref.dtype), v_ref[0],
        preferred_element_type=jnp.float32)
    m_ref[...] = m_new

    @pl.when(ki == nkv - 1)
    def _finalize():
        inv = pl.reciprocal(l_ref[...], approx=False)      # exact
        o_ref[0] = (acc_ref[...] * inv).astype(o_ref.dtype)


def multi_head_attention(q2d, k2d, v2d, *, B, Sq, Skv, num_heads, d_model,
                         tq=256, tkv=256):
    """q2d: (B*Sq, D); k2d/v2d: (B*Skv, D)  ->  (B*Sq, D)."""
    H = num_heads
    dk = d_model // H
    # Head split is wrapper-side layout plumbing (handled by XLA).
    q = q2d.reshape(B, Sq, H, dk).transpose(0, 2, 1, 3)
    k = k2d.reshape(B, Skv, H, dk).transpose(0, 2, 1, 3)
    v = v2d.reshape(B, Skv, H, dk).transpose(0, 2, 1, 3)

    Sqp, tq = _pick_row_tile(Sq, tq)
    if Sqp != Sq:
        q = jnp.pad(q, ((0, 0), (0, 0), (0, Sqp - Sq), (0, 0)))
    tkv = _pick_sublane_tile(Skv, tkv)
    nq, nkv = Sqp // tq, Skv // tkv
    scale = 1.0 / math.sqrt(dk)

    out = pl.pallas_call(
        functools.partial(_flash_attn_kernel, nkv=nkv, scale=scale),
        out_shape=jax.ShapeDtypeStruct((B, H, Sqp, dk), q.dtype),
        grid=(B, nq, nkv),
        in_specs=[
            pl.BlockSpec((1, H, tq, dk), lambda b, qi, ki: (b, 0, qi, 0)),
            pl.BlockSpec((1, H, tkv, dk), lambda b, qi, ki: (b, 0, ki, 0)),
            pl.BlockSpec((1, H, tkv, dk), lambda b, qi, ki: (b, 0, ki, 0)),
        ],
        out_specs=pl.BlockSpec((1, H, tq, dk), lambda b, qi, ki: (b, 0, qi, 0)),
        scratch_shapes=[pltpu.VMEM((H, tq, 1), jnp.float32),
                        pltpu.VMEM((H, tq, 1), jnp.float32),
                        pltpu.VMEM((H, tq, dk), jnp.float32)],
        compiler_params=pltpu.CompilerParams(
            dimension_semantics=("parallel", "parallel", "arbitrary"),
            vmem_limit_bytes=VMEM_LIMIT),
    )(q, k, v)
    out = out[:, :, :Sq, :]
    # Head merge back to a lane-dense (B*Sq, D) slab for the o-projection.
    return out.transpose(0, 2, 1, 3).reshape(B * Sq, d_model)


# ----------------------------------------------------------------------------
# Model glue: parameters (fused QKV / KV weights) + wiring of the kernels
# ----------------------------------------------------------------------------
def init_params(key, num_layers, d_model, d_ff):
    def w_init(k, din, dout):
        return jax.random.normal(k, (din, dout), jnp.float32) * 0.02

    def b_init(k, dout):
        return jax.random.normal(k, (dout,), jnp.float32) * 0.02

    def ln_init(k, d):
        kg, kb = jax.random.split(k)
        return {"g": 1.0 + 0.1 * jax.random.normal(kg, (d,), jnp.float32),
                "b": 0.1 * jax.random.normal(kb, (d,), jnp.float32)}

    layers = []
    keys = jax.random.split(key, num_layers + 1)
    for li in range(num_layers):
        ks = jax.random.split(keys[li], 16)
        layers.append({
            "self_attn": {
                "w_qkv": w_init(ks[0], d_model, 3 * d_model),
                "b_qkv": b_init(ks[1], 3 * d_model),
                "w_o": w_init(ks[2], d_model, d_model),
                "b_o": b_init(ks[3], d_model),
            },
            "cross_attn": {
                "w_q": w_init(ks[4], d_model, d_model),
                "b_q": b_init(ks[5], d_model),
                "w_kv": w_init(ks[6], d_model, 2 * d_model),
                "b_kv": b_init(ks[7], 2 * d_model),
                "w_o": w_init(ks[8], d_model, d_model),
                "b_o": b_init(ks[9], d_model),
            },
            "ff": {
                "w1": w_init(ks[10], d_model, d_ff),
                "b1": b_init(ks[11], d_ff),
                "w2": w_init(ks[12], d_ff, d_model),
                "b2": b_init(ks[13], d_model),
            },
            "ln1": ln_init(ks[14], d_model),
            "ln2": ln_init(ks[15], d_model),
            "ln3": ln_init(jax.random.fold_in(keys[li], 99), d_model),
        })
    final_ln = ln_init(keys[-1], d_model)
    return {"layers": layers, "final_ln": final_ln}


def decoder_layer(x2d, enc2d, p, *, B, S, Se, D, num_heads):
    # ---- self-attention sublayer (fused QKV projection) ------------------
    qkv = linear(x2d, p["self_attn"]["w_qkv"], p["self_attn"]["b_qkv"])
    attn = multi_head_attention(
        qkv[:, :D], qkv[:, D:2 * D], qkv[:, 2 * D:],
        B=B, Sq=S, Skv=S, num_heads=num_heads, d_model=D)
    x2d = linear_residual_layernorm(
        attn, p["self_attn"]["w_o"], p["self_attn"]["b_o"],
        x2d, p["ln1"]["g"], p["ln1"]["b"])

    # ---- cross-attention sublayer (fused KV projection) ------------------
    q = linear(x2d, p["cross_attn"]["w_q"], p["cross_attn"]["b_q"])
    kv = linear(enc2d, p["cross_attn"]["w_kv"], p["cross_attn"]["b_kv"])
    attn = multi_head_attention(
        q, kv[:, :D], kv[:, D:],
        B=B, Sq=S, Skv=Se, num_heads=num_heads, d_model=D)
    x2d = linear_residual_layernorm(
        attn, p["cross_attn"]["w_o"], p["cross_attn"]["b_o"],
        x2d, p["ln2"]["g"], p["ln2"]["b"])

    # ---- feed-forward sublayer --------------------------------------------
    h = linear(x2d, p["ff"]["w1"], p["ff"]["b1"], activation="relu")
    x2d = linear_residual_layernorm(
        h, p["ff"]["w2"], p["ff"]["b2"], x2d, p["ln3"]["g"], p["ln3"]["b"])
    return x2d


def decoder_forward(params, x, enc_out, num_heads):
    B, S, D = x.shape
    Se = enc_out.shape[1]
    assert D % num_heads == 0
    x2d = x.reshape(B * S, D)
    enc2d = enc_out.reshape(B * Se, D)
    for lp in params["layers"]:
        x2d = decoder_layer(x2d, enc2d, lp, B=B, S=S, Se=Se, D=D,
                            num_heads=num_heads)
    x2d = layernorm(x2d, params["final_ln"]["g"], params["final_ln"]["b"])
    return x2d.reshape(B, S, D)


# ----------------------------------------------------------------------------
# Pure-JAX reference (for a correctness check)
# ----------------------------------------------------------------------------
def _ref_ln(x, g, b):
    m = jnp.mean(x, axis=-1, keepdims=True)
    v = jnp.mean((x - m) ** 2, axis=-1, keepdims=True)
    return (x - m) * jax.lax.rsqrt(v + LN_EPS) * g + b


def _ref_attn(xq, xkv, wq, bq, wk, bk, wv, bv, wo, bo, H):
    B, Sq, D = xq.shape
    Skv = xkv.shape[1]
    dk = D // H
    q = (xq @ wq + bq).reshape(B, Sq, H, dk).transpose(0, 2, 1, 3)
    k = (xkv @ wk + bk).reshape(B, Skv, H, dk).transpose(0, 2, 1, 3)
    v = (xkv @ wv + bv).reshape(B, Skv, H, dk).transpose(0, 2, 1, 3)
    s = jnp.einsum("bhqd,bhkd->bhqk", q, k) / math.sqrt(dk)
    a = jax.nn.softmax(s, axis=-1)
    o = jnp.einsum("bhqk,bhkd->bhqd", a, v).transpose(0, 2, 1, 3).reshape(B, Sq, D)
    return o @ wo + bo


def decoder_reference(params, x, enc_out, H):
    D = x.shape[-1]
    for p in params["layers"]:
        sa = p["self_attn"]
        a1 = _ref_attn(x, x,
                       sa["w_qkv"][:, :D], sa["b_qkv"][:D],
                       sa["w_qkv"][:, D:2 * D], sa["b_qkv"][D:2 * D],
                       sa["w_qkv"][:, 2 * D:], sa["b_qkv"][2 * D:],
                       sa["w_o"], sa["b_o"], H)
        x = _ref_ln(x + a1, p["ln1"]["g"], p["ln1"]["b"])
        ca = p["cross_attn"]
        a2 = _ref_attn(x, enc_out,
                       ca["w_q"], ca["b_q"],
                       ca["w_kv"][:, :D], ca["b_kv"][:D],
                       ca["w_kv"][:, D:], ca["b_kv"][D:],
                       ca["w_o"], ca["b_o"], H)
        x = _ref_ln(x + a2, p["ln2"]["g"], p["ln2"]["b"])
        h = jnp.maximum(x @ p["ff"]["w1"] + p["ff"]["b1"], 0.0)
        f = h @ p["ff"]["w2"] + p["ff"]["b2"]
        x = _ref_ln(x + f, p["ln3"]["g"], p["ln3"]["b"])
    return _ref_ln(x, params["final_ln"]["g"], params["final_ln"]["b"])


# ----------------------------------------------------------------------------
if __name__ == "__main__":
    B, S_TGT, S_SRC = 2, 8, 8
    D_MODEL, N_HEADS, D_FF, N_LAYERS = 32, 4, 64, 2

    key = jax.random.PRNGKey(0)
    k_p, k_x, k_e = jax.random.split(key, 3)
    params = init_params(k_p, N_LAYERS, D_MODEL, D_FF)
    x = jax.random.normal(k_x, (B, S_TGT, D_MODEL), jnp.float32)
    enc_out = jax.random.normal(k_e, (B, S_SRC, D_MODEL), jnp.float32)

    out = decoder_forward(params, x, enc_out, N_HEADS)
    out = jax.block_until_ready(out)

    ref = decoder_reference(params, x, enc_out, N_HEADS)
    assert out.shape == (B, S_TGT, D_MODEL)
    max_err = float(jnp.max(jnp.abs(out - ref)))
    assert jnp.allclose(out, ref, atol=2e-3, rtol=2e-3), \
        f"mismatch vs JAX reference (max abs err {max_err})"

    print("KERNEL_OK")
</pallas_src>

<mosaic_0001>
module attributes {stable_mosaic.version = 11 : i64} {
  func.func @_linear_kernel_inplace(%arg0: i32, %arg1: i32, %arg2: i32, %arg3: memref<16x32xf32, #tpu.memory_space<vmem>>, %arg4: memref<32x96xf32, #tpu.memory_space<vmem>>, %arg5: memref<1x96xf32, #tpu.memory_space<vmem>>, %arg6: memref<16x96xf32, #tpu.memory_space<vmem>>) attributes {dimension_semantics = [#tpu.dimension_semantics<parallel>, #tpu.dimension_semantics<parallel>, #tpu.dimension_semantics<arbitrary>], iteration_bounds = array<i64: 1, 1, 1>, scalar_prefetch = 0 : i64, scratch_operands = 0 : i64, tpu.core_type = #tpu.core_type<tc>, window_params = [{transform_indices = @transform_0, window_bounds = array<i64: 16, 32>}, {transform_indices = @transform_1, window_bounds = array<i64: 32, 96>}, {transform_indices = @transform_2, window_bounds = array<i64: 1, 96>}, {transform_indices = @transform_3, window_bounds = array<i64: 16, 96>}]} {
    %c0_i32 = arith.constant 0 : i32
    %0 = arith.cmpi eq, %arg2, %c0_i32 : i32
    %1 = arith.extui %0 : i1 to i32
    %c0_i32_0 = arith.constant 0 : i32
    %2 = arith.cmpi ne, %1, %c0_i32_0 : i32
    scf.if %2 {
      %cst_10 = arith.constant 0.000000e+00 : f32
      %12 = vector.broadcast %cst_10 : f32 to vector<16x96xf32>
      %c0_11 = arith.constant 0 : index
      %c0_12 = arith.constant 0 : index
      %13 = vector.load %arg6[%c0_11, %c0_12] : memref<16x96xf32, #tpu.memory_space<vmem>>, vector<16x96xf32>
      tpu.vector_store %arg6[%c0_11, %c0_12], %12 {strides = array<i32>} : memref<16x96xf32, #tpu.memory_space<vmem>>, vector<16x96xf32>,
    } else {
    }
    %c0 = arith.constant 0 : index
    %c0_1 = arith.constant 0 : index
    %3 = vector.load %arg6[%c0, %c0_1] : memref<16x96xf32, #tpu.memory_space<vmem>>, vector<16x96xf32>
    %c0_2 = arith.constant 0 : index
    %c0_3 = arith.constant 0 : index
    %4 = vector.load %arg3[%c0_2, %c0_3] : memref<16x32xf32, #tpu.memory_space<vmem>>, vector<16x32xf32>
    %c0_4 = arith.constant 0 : index
    %c0_5 = arith.constant 0 : index
    %5 = vector.load %arg4[%c0_4, %c0_5] : memref<32x96xf32, #tpu.memory_space<vmem>>, vector<32x96xf32>
    %cst = arith.constant dense<0.000000e+00> : vector<16x96xf32>
    %6 = tpu.matmul %4, %5, %cst {dimension_numbers = #tpu.dot_dimension_numbers<[1], [0], [0], [1], [0, 0, 1, 1], [], []>} : vector<16x32xf32>, vector<32x96xf32>, vector<16x96xf32> -> vector<16x96xf32>
    %7 = arith.addf %3, %6 : vector<16x96xf32>
    %c0_6 = arith.constant 0 : index
    %c0_7 = arith.constant 0 : index
    %8 = vector.load %arg6[%c0_6, %c0_7] : memref<16x96xf32, #tpu.memory_space<vmem>>, vector<16x96xf32>
    tpu.vector_store %arg6[%c0_6, %c0_7], %7 {strides = array<i32>} : memref<16x96xf32, #tpu.memory_space<vmem>>, vector<16x96xf32>,
    %c0_i32_8 = arith.constant 0 : i32
    %9 = arith.cmpi eq, %arg2, %c0_i32_8 : i32
    %10 = arith.extui %9 : i1 to i32
    %c0_i32_9 = arith.constant 0 : i32
    %11 = arith.cmpi ne, %10, %c0_i32_9 : i32
    scf.if %11 {
      %c0_10 = arith.constant 0 : index
      %c0_11 = arith.constant 0 : index
      %12 = vector.load %arg6[%c0_10, %c0_11] : memref<16x96xf32, #tpu.memory_space<vmem>>, vector<16x96xf32>
      %c0_12 = arith.constant 0 : index
      %c0_13 = arith.constant 0 : index
      %13 = vector.load %arg5[%c0_12, %c0_13] : memref<1x96xf32, #tpu.memory_space<vmem>>, vector<1x96xf32>
      %14 = vector.broadcast %13 : vector<1x96xf32> to vector<16x96xf32>
      %15 = arith.addf %12, %14 : vector<16x96xf32>
      %c0_14 = arith.constant 0 : index
      %c0_15 = arith.constant 0 : index
      %16 = vector.load %arg6[%c0_14, %c0_15] : memref<16x96xf32, #tpu.memory_space<vmem>>, vector<16x96xf32>
      tpu.vector_store %arg6[%c0_14, %c0_15], %15 {strides = array<i32>} : memref<16x96xf32, #tpu.memory_space<vmem>>, vector<16x96xf32>,
    } else {
    }
    return
  }
  func.func @transform_0(%arg0: i32, %arg1: i32, %arg2: i32) -> (i32, i32) {
    %c0_i32 = arith.constant 0 : i32
    return %arg0, %arg2 : i32, i32
  }
  func.func @transform_1(%arg0: i32, %arg1: i32, %arg2: i32) -> (i32, i32) {
    %c0_i32 = arith.constant 0 : i32
    return %arg2, %arg1 : i32, i32
  }
  func.func @transform_2(%arg0: i32, %arg1: i32, %arg2: i32) -> (i32, i32) {
    %c0_i32 = arith.constant 0 : i32
    %c0_i32_0 = arith.constant 0 : i32
    return %c0_i32, %arg1 : i32, i32
  }
  func.func @transform_3(%arg0: i32, %arg1: i32, %arg2: i32) -> (i32, i32) {
    %c0_i32 = arith.constant 0 : i32
    return %arg0, %arg1 : i32, i32
  }
}

</mosaic_0001>

<llo_original>
// kernel: tpu_custom_call.1
$region0: #{tpu_custom_call.1}
  #allocation0 [shape = 'u32[]', space=smem, size = 0x4, offset = 0x4, fixed_abs, tag = 'smem constant byte address 0x4 - core index']
  #allocation1 [shape = 'u32[72,128]{1,0:T(1,128)}', space=vmem, size = 0x9000, scoped, tag = 'internal scratch']
  %s0 = inlined_call_operand.hbm [shape: f32[16,32], index: 0, kind: input, shape index: {}]
  %s1 = inlined_call_operand.hbm [shape: f32[32,96], index: 1, kind: input, shape index: {}]
  %s2 = inlined_call_operand.vmem [shape: f32[1,96], index: 2, kind: input, shape index: {}]
  %s3 = inlined_call_operand.hbm [shape: f32[16,96], index: 3, kind: output, shape index: {}]
  %s4 = sld [smem:[#allocation0]]
  $region38: #{tpu_custom_call.1} parent=0
    _
  %s6 = ssub.s32 1, %s4
  %s7 = scalar_select 0, %s6, %s4
  $region1: #{tpu_custom_call.1} parent=0
    #allocation2 [shape = 'u8[8192]{0}', space=vmem, size = 0x2000, scoped, tag = 'input window, operand 0, single buffered']
    #allocation3 [shape = 's32[1]{0}', space=sflag, size = 0x4, scoped, tag = 'scoped memory for tpu_custom_call.1']
    #allocation4 [shape = 's32[1]{0}', space=sflag, size = 0x4, scoped, tag = 'scoped memory for tpu_custom_call.1']
    #allocation5 [shape = 'u8[16384]{0}', space=vmem, size = 0x4000, scoped, tag = 'input window, operand 1, single buffered']
    #allocation6 [shape = 's32[1]{0}', space=sflag, size = 0x4, scoped, tag = 'scoped memory for tpu_custom_call.1']
    #allocation7 [shape = 'u8[8192]{0}', space=vmem, size = 0x2000, scoped, tag = 'output window, operand 0, single buffered']
    %8 = vsyncpa [#allocation3], 0
    %9 = vsyncpa [#allocation6], 0
    %10 = vsyncpa [#allocation4], 0
    // Predicated region
    $region2: #{tpu_custom_call.1} parent=1 // pred_check
      _
    $region3: #{tpu_custom_call.1} parent=1 // pred_check_branch
      %12 = sbr.rel (0) target = $region5
    $region4: #{tpu_custom_call.1} parent=1 // pred_region
      %14 = vsyncadd [#allocation3], 0
      %s15 = sshll.u32 %s0, 4
      %s16 = int_to_ptr.hbm [resolvable:$true] %s15
      %s17 = sshll.u32 [#allocation2], 4
      %s18 = int_to_ptr.vmem [resolvable:$true] %s17
      %23 = dma.hbm_to_vmem [thread:$0]  %s16, 256, %s18, [#allocation3], 128, 128, 8
    $region5: #{tpu_custom_call.1} parent=1 // pred_fallthru
      _
    // Predicated region
    $region6: #{tpu_custom_call.1} parent=1 // pred_check
      _
    $region7: #{tpu_custom_call.1} parent=1 // pred_check_branch
      %25 = sbr.rel (0) target = $region9
    $region8: #{tpu_custom_call.1} parent=1 // pred_region
      %27 = vsyncadd [#allocation6], 0
      %s28 = sshll.u32 %s1, 4
      %s29 = int_to_ptr.hbm [resolvable:$true] %s28
      %s30 = sshll.u32 [#allocation5], 4
      %s31 = int_to_ptr.vmem [resolvable:$true] %s30
      %36 = dma.hbm_to_vmem [thread:$0]  %s29, 512, %s31, [#allocation6], 128, 128, 8
    $region9: #{tpu_custom_call.1} parent=1 // pred_fallthru
      _
    // Predicated region
    $region10: #{tpu_custom_call.1} parent=1 // pred_check
      _
    $region11: #{tpu_custom_call.1} parent=1 // pred_check_branch
      %38 = sbr.rel (0) target = $region13
    $region12: #{tpu_custom_call.1} parent=1 // pred_region
      _
    $region13: #{tpu_custom_call.1} parent=1 // pred_fallthru
      _
    // Predicated region
    $region14: #{tpu_custom_call.1} parent=1 // pred_check
      _
    $region15: #{tpu_custom_call.1} parent=1 // pred_check_branch
      %40 = sbr.rel (0) target = $region17
    $region16: #{tpu_custom_call.1} parent=1 // pred_region
      %42 = dma.done [#allocation3], 256
    $region17: #{tpu_custom_call.1} parent=1 // pred_fallthru
      _
    // Predicated region
    $region18: #{tpu_custom_call.1} parent=1 // pred_check
      _
    $region19: #{tpu_custom_call.1} parent=1 // pred_check_branch
      %44 = sbr.rel (0) target = $region21
    $region20: #{tpu_custom_call.1} parent=1 // pred_region
      %46 = dma.done [#allocation6], 512
    $region21: #{tpu_custom_call.1} parent=1 // pred_fallthru
      _
    %p47 = scmp.eq.s32.totalorder 0, 0
    // Predicated region
    $region22: #{tpu_custom_call.1} parent=1 // pred_check
      %p48 = pneg %p47
    $region23: #{tpu_custom_call.1} parent=1 // pred_check_branch
      %50 = sbr.rel (%p48) target = $region25
    $region24: #{tpu_custom_call.1} parent=1 // pred_region
      %vm51 = vcmask 785408
      %52 = vst.msk [vmem:[#allocation7] sm:$0xff] %vm51, 0.0
      %53 = vst.msk [vmem:[#allocation7 + $0x8] sm:$0xff] %vm51, 0.0
    $region25: #{tpu_custom_call.1} parent=1 // pred_fallthru
      _
    %v54 = vld [vmem:[#allocation7] sm:$0xff]
    %v55 = vld [vmem:[#allocation7 + $0x8] sm:$0xff]
    %v56 = vld [vmem:[#allocation2] sm:$0xff]
    %v57 = vld [vmem:[#allocation2 + $0x8] sm:$0xff]
    %v58 = vld [vmem:[#allocation5] sm:$0xff]
    %v59 = vld [vmem:[#allocation5 + $0x8] sm:$0xff]
    %v60 = vld [vmem:[#allocation5 + $0x10] sm:$0xff]
    %v61 = vld [vmem:[#allocation5 + $0x18] sm:$0xff]
    %vm62 = vcmask 261120
    %v64 = vsel %vm62, %v56, 0
    %v67 = vsel %vm62, %v57, 0
    %69 = vmatpush.msra.mxu0 0.0
    %70 = vmatpush.msra.mxu0 0.0
    %71 = vmatpush.msra.mxu0 0.0
    %72 = vmatpush.msra.mxu0 0.0
    %73 = vmatpush.msra.mxu0 0.0
    %74 = vmatpush.msra.mxu0 0.0
    %75 = vmatpush.msra.mxu0 0.0
    %76 = vmatpush.msra.mxu0 0.0
    %77 = vmatpush.msra.mxu0 0.0
    %78 = vmatpush.msra.mxu0 0.0
    %79 = vmatpush.msra.mxu0 0.0
    %80 = vmatpush.msra.mxu0 0.0
    %81 = vmatpush.msra.mxu0 %v61
    %82 = vmatpush.msra.mxu0 %v60
    %83 = vmatpush.msra.mxu0 %v59
    %84 = vmatpush.msra.mxu0 %v58
    %85 = vmatmul.f32.gmra.mxu0 %v64
    %v86 = vpop.f32.mrf.mxu0
    %v87 = vadd.f32 0.0, %v86
    %88 = vmatmul.f32.gmra.mxu0 %v67
    %v89 = vpop.f32.mrf.mxu0
    %v90 = vadd.f32 0.0, %v89
    %91 = vdwg.mxu0
    %v92 = vadd.f32 %v54, %v87
    %v93 = vadd.f32 %v55, %v90
    %vm94 = vcmask 785408
    %95 = vst.msk [vmem:[#allocation7] sm:$0xff] %vm94, %v92
    %96 = vst.msk [vmem:[#allocation7 + $0x8] sm:$0xff] %vm94, %v93
    // Predicated region
    $region26: #{tpu_custom_call.1} parent=1 // pred_check
      %p97 = pneg %p47
    $region27: #{tpu_custom_call.1} parent=1 // pred_check_branch
      %99 = sbr.rel (%p97) target = $region29
    $region28: #{tpu_custom_call.1} parent=1 // pred_region
      %v100 = vld [vmem:[#allocation7] sm:$0xff]
      %v101 = vld [vmem:[#allocation7 + $0x8] sm:$0xff]
      %v102 = vld [vmem:[%s2] sm:$0x1]
      %v104 = vperm.slane %v102, 0
      %v106 = vadd.f32 %v100, %v104
      %v107 = vadd.f32 %v101, %v104
      %108 = vst.msk [vmem:[#allocation7] sm:$0xff] %vm94, %v106
      %109 = vst.msk [vmem:[#allocation7 + $0x8] sm:$0xff] %vm94, %v107
    $region29: #{tpu_custom_call.1} parent=1 // pred_fallthru
      _
    // Predicated region
    $region30: #{tpu_custom_call.1} parent=1 // pred_check
      _
    $region31: #{tpu_custom_call.1} parent=1 // pred_check_branch
      %111 = sbr.rel (0) target = $region33
    $region32: #{tpu_custom_call.1} parent=1 // pred_region
      %113 = vsyncadd [#allocation4], 0
      %s114 = sshll.u32 [#allocation7], 4
      %s115 = int_to_ptr.vmem [resolvable:$true] %s114
      %s116 = sshll.u32 %s3, 4
      %s117 = int_to_ptr.hbm [resolvable:$true] %s116
      %122 = dma.vmem_to_hbm [thread:$0]  %s115, 256, %s117, [#allocation4], 128, 128, 8
    $region33: #{tpu_custom_call.1} parent=1 // pred_fallthru
      _
    // Predicated region
    $region34: #{tpu_custom_call.1} parent=1 // pred_check
      _
    $region35: #{tpu_custom_call.1} parent=1 // pred_check_branch
      %124 = sbr.rel (0) target = $region37
    $region36: #{tpu_custom_call.1} parent=1 // pred_region
      %126 = dma.done [#allocation4], 256
    $region37: #{tpu_custom_call.1} parent=1 // pred_fallthru
      _
    %127 = vsyncpa [#allocation3], 1
    %128 = vsyncpa [#allocation6], 1
    %129 = vsyncpa [#allocation4], 1

</llo_original>
